<compile_context>
chip_gen: v5e
topology: v5e:2x2
jax: 0.10.0
libtpu: 0.0.40
codegen_flags: <defaults>
</compile_context>

<pallas_src>
import math

import jax
import jax.numpy as jnp
from jax.experimental import pallas as pl
from jax.experimental.pallas import tpu as pltpu

LANE = 128     # vreg lane width  (last dim)
SUBLANE = 8    # f32 sublane rows (second-to-last dim)


def _round_up(x, m):
    return ((x + m - 1) // m) * m


def make_mlp_actor_kernel(act_limit: float, compute_dtype):
    """fc1 -> relu -> fc2 -> relu -> fc3 -> tanh -> *act_limit, fully fused."""

    def kernel(x_ref, w1_ref, b1_ref, w2_ref, b2_ref, w3_ref, b3_ref, o_ref):
        # Matmul operands in compute_dtype (bf16 on v6e/v7x MXU); f32 accumulate.
        x = x_ref[...].astype(compute_dtype)

        h1 = jnp.dot(x, w1_ref[...], preferred_element_type=jnp.float32) + b1_ref[...]
        h1 = jnp.maximum(h1, 0.0)                                  # ReLU (f32, VPU)

        h2 = jnp.dot(h1.astype(compute_dtype), w2_ref[...],
                     preferred_element_type=jnp.float32) + b2_ref[...]
        h2 = jnp.maximum(h2, 0.0)                                  # ReLU

        y = jnp.dot(h2.astype(compute_dtype), w3_ref[...],
                    preferred_element_type=jnp.float32) + b3_ref[...]
        y = jnp.tanh(y)                                            # tanh (EUP)

        o_ref[...] = (act_limit * y).astype(o_ref.dtype)

    return kernel


def mlp_actor_forward(state, params, act_limit, *, block_batch=256,
                      compute_dtype=jnp.bfloat16):
    """Pallas-call wrapper: pads to TPU tile granularity, tiles over batch."""
    w1, b1, w2, b2, w3, b3 = params
    batch, obs_dim = state.shape
    hidden = w1.shape[1]
    act_dim = w3.shape[1]

    # ---- lane-dense output: pad fc3 output features to a multiple of 128 ----
    act_pad = _round_up(act_dim, LANE)
    if act_pad != act_dim:
        w3 = jnp.pad(w3, ((0, 0), (0, act_pad - act_dim)))
        b3 = jnp.pad(b3, ((0, 0), (0, act_pad - act_dim)))

    # ---- batch tiling: tile is a multiple of 8 sublanes, batch padded to it ----
    tb = _round_up(min(block_batch, _round_up(batch, SUBLANE)), SUBLANE)
    padded_batch = _round_up(batch, tb)
    if padded_batch != batch:
        state = jnp.pad(state, ((0, padded_batch - batch), (0, 0)))

    # Weights feed the MXU in compute_dtype; biases (post-accumulation) stay f32.
    w1c = w1.astype(compute_dtype)
    w2c = w2.astype(compute_dtype)
    w3c = w3.astype(compute_dtype)

    grid = (padded_batch // tb,)

    in_specs = [
        pl.BlockSpec((tb, obs_dim), lambda i: (i, 0)),      # state tile (streamed)
        pl.BlockSpec((obs_dim, hidden), lambda i: (0, 0)),  # w1  (VMEM resident)
        pl.BlockSpec((1, hidden), lambda i: (0, 0)),        # b1
        pl.BlockSpec((hidden, hidden), lambda i: (0, 0)),   # w2
        pl.BlockSpec((1, hidden), lambda i: (0, 0)),        # b2
        pl.BlockSpec((hidden, act_pad), lambda i: (0, 0)),  # w3 (lane-padded)
        pl.BlockSpec((1, act_pad), lambda i: (0, 0)),       # b3 (lane-padded)
    ]
    out_specs = pl.BlockSpec((tb, act_pad), lambda i: (i, 0))

    flops = 2 * padded_batch * (obs_dim * hidden + hidden * hidden + hidden * act_pad)
    bytes_accessed = (
        state.size * state.dtype.itemsize
        + w1c.size * w1c.dtype.itemsize
        + w2c.size * w2c.dtype.itemsize
        + w3c.size * w3c.dtype.itemsize
        + (b1.size + b2.size + b3.size) * 4
        + padded_batch * act_pad * 4
    )
    cost = pl.CostEstimate(flops=flops,
                           transcendentals=padded_batch * act_pad,
                           bytes_accessed=bytes_accessed)

    out = pl.pallas_call(
        make_mlp_actor_kernel(act_limit, compute_dtype),
        out_shape=jax.ShapeDtypeStruct((padded_batch, act_pad), jnp.float32),
        grid=grid,
        in_specs=in_specs,
        out_specs=out_specs,
        compiler_params=pltpu.CompilerParams(
            dimension_semantics=("parallel",),       # batch tiles are independent
            vmem_limit_bytes=32 * 1024 * 1024,
        ),
        cost_estimate=cost,
    )(state, w1c, b1, w2c, b2, w3c, b3)

    # Strip batch / lane padding.
    return out[:batch, :act_dim]


def init_mlp_actor_params(key, obs_dim, act_dim, hidden_dim=128, init_w=0.003):
    """Mirrors PyTorch init:
       fc1/fc2: U(-1/sqrt(fan_in), 1/sqrt(fan_in)) for W and b (Linear default)
       fc3:     U(-init_w, init_w) for W and b.
       Weights are (in_features, out_features)."""
    k1w, k1b, k2w, k2b, k3w, k3b = jax.random.split(key, 6)

    def lin(kw, kb, fan_in, fan_out, bound):
        w = jax.random.uniform(kw, (fan_in, fan_out), jnp.float32, -bound, bound)
        b = jax.random.uniform(kb, (1, fan_out), jnp.float32, -bound, bound)
        return w, b

    w1, b1 = lin(k1w, k1b, obs_dim, hidden_dim, 1.0 / math.sqrt(obs_dim))
    w2, b2 = lin(k2w, k2b, hidden_dim, hidden_dim, 1.0 / math.sqrt(hidden_dim))
    w3, b3 = lin(k3w, k3b, hidden_dim, act_dim, init_w)
    return (w1, b1, w2, b2, w3, b3)


def mlp_actor_reference(state, params, act_limit, compute_dtype=jnp.bfloat16):
    """Plain-JAX reference with identical dtype handling as the kernel."""
    w1, b1, w2, b2, w3, b3 = params
    cd = compute_dtype
    h1 = jnp.maximum(
        jnp.dot(state.astype(cd), w1.astype(cd), preferred_element_type=jnp.float32) + b1, 0.0)
    h2 = jnp.maximum(
        jnp.dot(h1.astype(cd), w2.astype(cd), preferred_element_type=jnp.float32) + b2, 0.0)
    y = jnp.tanh(
        jnp.dot(h2.astype(cd), w3.astype(cd), preferred_element_type=jnp.float32) + b3)
    return act_limit * y


if __name__ == "__main__":
    # Small, module-consistent shapes: state is (batch, obs_dim).
    batch, obs_dim, act_dim, hidden_dim = 4, 16, 8, 32
    act_limit = 2.0

    key = jax.random.PRNGKey(0)
    k_state, k_params, k_big = jax.random.split(key, 3)

    state = jax.random.normal(k_state, (batch, obs_dim), dtype=jnp.float32)
    params = init_mlp_actor_params(k_params, obs_dim, act_dim, hidden_dim)

    out = jax.block_until_ready(mlp_actor_forward(state, params, act_limit))
    ref = mlp_actor_reference(state, params, act_limit)
    assert out.shape == (batch, act_dim)
    assert jnp.allclose(out, ref, atol=1e-4, rtol=1e-4), "mismatch vs reference (small batch)"

    # Exercise the batch grid + padding path (multi-tile, non-multiple batch).
    big_batch = 300
    big_state = jax.random.normal(k_big, (big_batch, obs_dim), dtype=jnp.float32)
    out_big = jax.block_until_ready(
        mlp_actor_forward(big_state, params, act_limit, block_batch=128))
    ref_big = mlp_actor_reference(big_state, params, act_limit)
    assert out_big.shape == (big_batch, act_dim)
    assert jnp.allclose(out_big, ref_big, atol=1e-4, rtol=1e-4), "mismatch vs reference (tiled batch)"

    print("KERNEL_OK")
</pallas_src>

<mosaic_0001>
module attributes {stable_mosaic.version = 11 : i64} {
  func.func @kernel(%arg0: i32, %arg1: memref<8x16xf32, #tpu.memory_space<vmem>>, %arg2: memref<16x32xbf16, #tpu.memory_space<vmem>>, %arg3: memref<1x32xf32, #tpu.memory_space<vmem>>, %arg4: memref<32x32xbf16, #tpu.memory_space<vmem>>, %arg5: memref<1x32xf32, #tpu.memory_space<vmem>>, %arg6: memref<32x128xbf16, #tpu.memory_space<vmem>>, %arg7: memref<1x128xf32, #tpu.memory_space<vmem>>, %arg8: memref<8x128xf32, #tpu.memory_space<vmem>>) attributes {dimension_semantics = [#tpu.dimension_semantics<parallel>], iteration_bounds = array<i64: 1>, scalar_prefetch = 0 : i64, scratch_operands = 0 : i64, tpu.core_type = #tpu.core_type<tc>, window_params = [{transform_indices = @transform_0, window_bounds = array<i64: 8, 16>}, {pipeline_mode = #tpu.pipeline_mode<synchronous>, transform_indices = @transform_1, window_bounds = array<i64: 16, 32>}, {pipeline_mode = #tpu.pipeline_mode<synchronous>, transform_indices = @transform_2, window_bounds = array<i64: 1, 32>}, {pipeline_mode = #tpu.pipeline_mode<synchronous>, transform_indices = @transform_3, window_bounds = array<i64: 32, 32>}, {pipeline_mode = #tpu.pipeline_mode<synchronous>, transform_indices = @transform_4, window_bounds = array<i64: 1, 32>}, {pipeline_mode = #tpu.pipeline_mode<synchronous>, transform_indices = @transform_5, window_bounds = array<i64: 32, 128>}, {pipeline_mode = #tpu.pipeline_mode<synchronous>, transform_indices = @transform_6, window_bounds = array<i64: 1, 128>}, {transform_indices = @transform_7, window_bounds = array<i64: 8, 128>}]} {
    %c0 = arith.constant 0 : index
    %c0_0 = arith.constant 0 : index
    %0 = vector.load %arg1[%c0, %c0_0] : memref<8x16xf32, #tpu.memory_space<vmem>>, vector<8x16xf32>
    %1 = arith.truncf %0 : vector<8x16xf32> to vector<8x16xbf16>
    %c0_1 = arith.constant 0 : index
    %c0_2 = arith.constant 0 : index
    %2 = vector.load %arg2[%c0_1, %c0_2] : memref<16x32xbf16, #tpu.memory_space<vmem>>, vector<16x32xbf16>
    %cst = arith.constant dense<0.000000e+00> : vector<8x32xf32>
    %3 = tpu.matmul %1, %2, %cst {dimension_numbers = #tpu.dot_dimension_numbers<[1], [0], [0], [1], [0, 0, 1, 1], [], []>} : vector<8x16xbf16>, vector<16x32xbf16>, vector<8x32xf32> -> vector<8x32xf32>
    %c0_3 = arith.constant 0 : index
    %c0_4 = arith.constant 0 : index
    %4 = vector.load %arg3[%c0_3, %c0_4] : memref<1x32xf32, #tpu.memory_space<vmem>>, vector<1x32xf32>
    %5 = vector.broadcast %4 : vector<1x32xf32> to vector<8x32xf32>
    %6 = arith.addf %3, %5 : vector<8x32xf32>
    %cst_5 = arith.constant 0.000000e+00 : f32
    %7 = vector.broadcast %cst_5 : f32 to vector<8x32xf32>
    %8 = arith.maximumf %6, %7 : vector<8x32xf32>
    %9 = arith.truncf %8 : vector<8x32xf32> to vector<8x32xbf16>
    %c0_6 = arith.constant 0 : index
    %c0_7 = arith.constant 0 : index
    %10 = vector.load %arg4[%c0_6, %c0_7] : memref<32x32xbf16, #tpu.memory_space<vmem>>, vector<32x32xbf16>
    %cst_8 = arith.constant dense<0.000000e+00> : vector<8x32xf32>
    %11 = tpu.matmul %9, %10, %cst_8 {dimension_numbers = #tpu.dot_dimension_numbers<[1], [0], [0], [1], [0, 0, 1, 1], [], []>} : vector<8x32xbf16>, vector<32x32xbf16>, vector<8x32xf32> -> vector<8x32xf32>
    %c0_9 = arith.constant 0 : index
    %c0_10 = arith.constant 0 : index
    %12 = vector.load %arg5[%c0_9, %c0_10] : memref<1x32xf32, #tpu.memory_space<vmem>>, vector<1x32xf32>
    %13 = vector.broadcast %12 : vector<1x32xf32> to vector<8x32xf32>
    %14 = arith.addf %11, %13 : vector<8x32xf32>
    %cst_11 = arith.constant 0.000000e+00 : f32
    %15 = vector.broadcast %cst_11 : f32 to vector<8x32xf32>
    %16 = arith.maximumf %14, %15 : vector<8x32xf32>
    %17 = arith.truncf %16 : vector<8x32xf32> to vector<8x32xbf16>
    %c0_12 = arith.constant 0 : index
    %c0_13 = arith.constant 0 : index
    %18 = vector.load %arg6[%c0_12, %c0_13] : memref<32x128xbf16, #tpu.memory_space<vmem>>, vector<32x128xbf16>
    %cst_14 = arith.constant dense<0.000000e+00> : vector<8x128xf32>
    %19 = tpu.matmul %17, %18, %cst_14 {dimension_numbers = #tpu.dot_dimension_numbers<[1], [0], [0], [1], [0, 0, 1, 1], [], []>} : vector<8x32xbf16>, vector<32x128xbf16>, vector<8x128xf32> -> vector<8x128xf32>
    %c0_15 = arith.constant 0 : index
    %c0_16 = arith.constant 0 : index
    %20 = vector.load %arg7[%c0_15, %c0_16] : memref<1x128xf32, #tpu.memory_space<vmem>>, vector<1x128xf32>
    %21 = vector.broadcast %20 : vector<1x128xf32> to vector<8x128xf32>
    %22 = arith.addf %19, %21 : vector<8x128xf32>
    %23 = math.tanh %22 : vector<8x128xf32>
    %cst_17 = arith.constant 2.000000e+00 : f32
    %24 = vector.broadcast %cst_17 : f32 to vector<8x128xf32>
    %25 = arith.mulf %24, %23 : vector<8x128xf32>
    %c0_18 = arith.constant 0 : index
    %c0_19 = arith.constant 0 : index
    %26 = vector.load %arg8[%c0_18, %c0_19] : memref<8x128xf32, #tpu.memory_space<vmem>>, vector<8x128xf32>
    tpu.vector_store %arg8[%c0_18, %c0_19], %25 {strides = array<i32>} : memref<8x128xf32, #tpu.memory_space<vmem>>, vector<8x128xf32>,
    return
  }
  func.func @transform_0(%arg0: i32) -> (i32, i32) {
    %c0_i32 = arith.constant 0 : i32
    %c0_i32_0 = arith.constant 0 : i32
    return %arg0, %c0_i32 : i32, i32
  }
  func.func @transform_1(%arg0: i32) -> (i32, i32) {
    %c0_i32 = arith.constant 0 : i32
    %c0_i32_0 = arith.constant 0 : i32
    %c0_i32_1 = arith.constant 0 : i32
    return %c0_i32, %c0_i32_0 : i32, i32
  }
  func.func @transform_2(%arg0: i32) -> (i32, i32) {
    %c0_i32 = arith.constant 0 : i32
    %c0_i32_0 = arith.constant 0 : i32
    %c0_i32_1 = arith.constant 0 : i32
    return %c0_i32, %c0_i32_0 : i32, i32
  }
  func.func @transform_3(%arg0: i32) -> (i32, i32) {
    %c0_i32 = arith.constant 0 : i32
    %c0_i32_0 = arith.constant 0 : i32
    %c0_i32_1 = arith.constant 0 : i32
    return %c0_i32, %c0_i32_0 : i32, i32
  }
  func.func @transform_4(%arg0: i32) -> (i32, i32) {
    %c0_i32 = arith.constant 0 : i32
    %c0_i32_0 = arith.constant 0 : i32
    %c0_i32_1 = arith.constant 0 : i32
    return %c0_i32, %c0_i32_0 : i32, i32
  }
  func.func @transform_5(%arg0: i32) -> (i32, i32) {
    %c0_i32 = arith.constant 0 : i32
    %c0_i32_0 = arith.constant 0 : i32
    %c0_i32_1 = arith.constant 0 : i32
    return %c0_i32, %c0_i32_0 : i32, i32
  }
  func.func @transform_6(%arg0: i32) -> (i32, i32) {
    %c0_i32 = arith.constant 0 : i32
    %c0_i32_0 = arith.constant 0 : i32
    %c0_i32_1 = arith.constant 0 : i32
    return %c0_i32, %c0_i32_0 : i32, i32
  }
  func.func @transform_7(%arg0: i32) -> (i32, i32) {
    %c0_i32 = arith.constant 0 : i32
    %c0_i32_0 = arith.constant 0 : i32
    return %arg0, %c0_i32 : i32, i32
  }
}

</mosaic_0001>

<llo_original>
// kernel: tpu_custom_call.1
$region0: #{tpu_custom_call.1}
  #allocation0 [shape = 'u32[]', space=smem, size = 0x4, offset = 0x4, fixed_abs, tag = 'smem constant byte address 0x4 - core index']
  #allocation1 [shape = 'u32[72,128]{1,0:T(1,128)}', space=vmem, size = 0x9000, scoped, tag = 'internal scratch']
  %s0 = inlined_call_operand.hbm [shape: f32[8,16], index: 0, kind: input, shape index: {}]
  %s1 = inlined_call_operand.hbm [shape: bf16[16,32], index: 1, kind: input, shape index: {}]
  %s2 = inlined_call_operand.vmem [shape: f32[1,32], index: 2, kind: input, shape index: {}]
  %s3 = inlined_call_operand.hbm [shape: bf16[32,32], index: 3, kind: input, shape index: {}]
  %s4 = inlined_call_operand.vmem [shape: f32[1,32], index: 4, kind: input, shape index: {}]
  %s5 = inlined_call_operand.hbm [shape: bf16[32,128], index: 5, kind: input, shape index: {}]
  %s6 = inlined_call_operand.vmem [shape: f32[1,128], index: 6, kind: input, shape index: {}]
  %s7 = inlined_call_operand.hbm [shape: f32[8,128], index: 7, kind: output, shape index: {}]
  %s8 = sld [smem:[#allocation0]]
  $region54: #{tpu_custom_call.1} parent=0
    _
  %s10 = ssub.s32 1, %s8
  %s11 = scalar_select 0, %s10, %s8
  $region1: #{tpu_custom_call.1} parent=0
    #allocation2 [shape = 'u8[4096]{0}', space=vmem, size = 0x1000, scoped, tag = 'input window, operand 0, single buffered']
    #allocation3 [shape = 's32[1]{0}', space=sflag, size = 0x4, scoped, tag = 'scoped memory for tpu_custom_call.1']
    #allocation4 [shape = 's32[1]{0}', space=sflag, size = 0x4, scoped, tag = 'scoped memory for tpu_custom_call.1']
    #allocation5 [shape = 'u8[4096]{0}', space=vmem, size = 0x1000, scoped, tag = 'input window, operand 1, single buffered']
    #allocation6 [shape = 's32[1]{0}', space=sflag, size = 0x4, scoped, tag = 'scoped memory for tpu_custom_call.1']
    #allocation7 [shape = 'u8[8192]{0}', space=vmem, size = 0x2000, scoped, tag = 'input window, operand 3, single buffered']
    #allocation8 [shape = 'u8[8192]{0}', space=vmem, size = 0x2000, scoped, tag = 'input window, operand 5, single buffered']
    #allocation9 [shape = 's32[1]{0}', space=sflag, size = 0x4, scoped, tag = 'scoped memory for tpu_custom_call.1']
    #allocation10 [shape = 'u8[4096]{0}', space=vmem, size = 0x1000, scoped, tag = 'output window, operand 0, single buffered']
    %12 = vsyncpa [#allocation3], 0
    %13 = vsyncpa [#allocation6], 0
    %14 = vsyncpa [#allocation9], 0
    %15 = vsyncpa [#allocation4], 0
    // Predicated region
    $region2: #{tpu_custom_call.1} parent=1 // pred_check
      _
    $region3: #{tpu_custom_call.1} parent=1 // pred_check_branch
      %17 = sbr.rel (0) target = $region5
    $region4: #{tpu_custom_call.1} parent=1 // pred_region
      %19 = vsyncadd [#allocation3], 0
      %s21 = sshll.u32 %s0, 4
      %s22 = int_to_ptr.hbm [resolvable:$true] %s21
      %s23 = sshll.u32 [#allocation2], 4
      %s24 = int_to_ptr.vmem [resolvable:$true] %s23
      %26 = dma.hbm_to_vmem [thread:$0]  %s22, 128, %s24, [#allocation3]
    $region5: #{tpu_custom_call.1} parent=1 // pred_fallthru
      _
    // Predicated region
    $region6: #{tpu_custom_call.1} parent=1 // pred_check
      _
    $region7: #{tpu_custom_call.1} parent=1 // pred_check_branch
      %28 = sbr.rel (0) target = $region9
    $region8: #{tpu_custom_call.1} parent=1 // pred_region
      %30 = vsyncadd [#allocation6], 0
      %s31 = sshll.u32 %s1, 4
      %s32 = int_to_ptr.hbm [resolvable:$true] %s31
      %s33 = sshll.u32 [#allocation5], 4
      %s34 = int_to_ptr.vmem [resolvable:$true] %s33
      %39 = dma.hbm_to_vmem [thread:$0]  %s32, 128, %s34, [#allocation6], 64, 64, 4
    $region9: #{tpu_custom_call.1} parent=1 // pred_fallthru
      _
    // Predicated region
    $region10: #{tpu_custom_call.1} parent=1 // pred_check
      _
    $region11: #{tpu_custom_call.1} parent=1 // pred_check_branch
      %41 = sbr.rel (0) target = $region13
    $region12: #{tpu_custom_call.1} parent=1 // pred_region
      _
    $region13: #{tpu_custom_call.1} parent=1 // pred_fallthru
      _
    // Predicated region
    $region14: #{tpu_custom_call.1} parent=1 // pred_check
      _
    $region15: #{tpu_custom_call.1} parent=1 // pred_check_branch
      %43 = sbr.rel (0) target = $region17
    $region16: #{tpu_custom_call.1} parent=1 // pred_region
      %45 = vsyncadd [#allocation6], 0
      %s46 = sshll.u32 %s3, 4
      %s47 = int_to_ptr.hbm [resolvable:$true] %s46
      %s48 = sshll.u32 [#allocation7], 4
      %s49 = int_to_ptr.vmem [resolvable:$true] %s48
      %54 = dma.hbm_to_vmem [thread:$0]  %s47, 256, %s49, [#allocation6], 64, 64, 4
    $region17: #{tpu_custom_call.1} parent=1 // pred_fallthru
      _
    // Predicated region
    $region18: #{tpu_custom_call.1} parent=1 // pred_check
      _
    $region19: #{tpu_custom_call.1} parent=1 // pred_check_branch
      %56 = sbr.rel (0) target = $region21
    $region20: #{tpu_custom_call.1} parent=1 // pred_region
      _
    $region21: #{tpu_custom_call.1} parent=1 // pred_fallthru
      _
    // Predicated region
    $region22: #{tpu_custom_call.1} parent=1 // pred_check
      _
    $region23: #{tpu_custom_call.1} parent=1 // pred_check_branch
      %58 = sbr.rel (0) target = $region25
    $region24: #{tpu_custom_call.1} parent=1 // pred_region
      %60 = vsyncadd [#allocation9], 0
      %s61 = sshll.u32 %s5, 4
      %s62 = int_to_ptr.hbm [resolvable:$true] %s61
      %s63 = sshll.u32 [#allocation8], 4
      %s64 = int_to_ptr.vmem [resolvable:$true] %s63
      %69 = dma.hbm_to_vmem [thread:$0]  %s62, 256, %s64, [#allocation9], 64, 64, 4
    $region25: #{tpu_custom_call.1} parent=1 // pred_fallthru
      _
    // Predicated region
    $region26: #{tpu_custom_call.1} parent=1 // pred_check
      _
    $region27: #{tpu_custom_call.1} parent=1 // pred_check_branch
      %71 = sbr.rel (0) target = $region29
    $region28: #{tpu_custom_call.1} parent=1 // pred_region
      _
    $region29: #{tpu_custom_call.1} parent=1 // pred_fallthru
      _
    // Predicated region
    $region30: #{tpu_custom_call.1} parent=1 // pred_check
      _
    $region31: #{tpu_custom_call.1} parent=1 // pred_check_branch
      %73 = sbr.rel (0) target = $region33
    $region32: #{tpu_custom_call.1} parent=1 // pred_region
      %75 = dma.done [#allocation3], 128
    $region33: #{tpu_custom_call.1} parent=1 // pred_fallthru
      _
    // Predicated region
    $region34: #{tpu_custom_call.1} parent=1 // pred_check
      _
    $region35: #{tpu_custom_call.1} parent=1 // pred_check_branch
      %77 = sbr.rel (0) target = $region37
    $region36: #{tpu_custom_call.1} parent=1 // pred_region
      %79 = dma.done [#allocation6], 128
    $region37: #{tpu_custom_call.1} parent=1 // pred_fallthru
      _
    // Predicated region
    $region38: #{tpu_custom_call.1} parent=1 // pred_check
      _
    $region39: #{tpu_custom_call.1} parent=1 // pred_check_branch
      %81 = sbr.rel (0) target = $region41
    $region40: #{tpu_custom_call.1} parent=1 // pred_region
      %83 = dma.done [#allocation6], 256
    $region41: #{tpu_custom_call.1} parent=1 // pred_fallthru
      _
    // Predicated region
    $region42: #{tpu_custom_call.1} parent=1 // pred_check
      _
    $region43: #{tpu_custom_call.1} parent=1 // pred_check_branch
      %85 = sbr.rel (0) target = $region45
    $region44: #{tpu_custom_call.1} parent=1 // pred_region
      %87 = dma.done [#allocation9], 256
    $region45: #{tpu_custom_call.1} parent=1 // pred_fallthru
      _
    %v89 = vld [vmem:[#allocation2] sm:$0xff]
    %v90 = vpack.c.bf16 %v89, %v89
    %v91 = vld [vmem:[#allocation5] sm:$0xf]
    %v92 = vld [vmem:[#allocation5 + $0x4] sm:$0xf]
    %v93 = vld [vmem:[%s2] sm:$0x1]
    %v95 = vperm.slane %v93, 0
    %v99 = vunpack.c.l.b16 %v91
    %v100 = vunpack.c.l.b16 %v92
    %v101 = vpack.c.b16 %v100, %v99
    %vm103 = vcmask 130048
    %v105 = vsel %vm103, %v90, 0
    %107 = vmatpush.bf16.msra.mxu0 0
    %108 = vmatpush.bf16.msra.mxu0 0
    %109 = vmatpush.bf16.msra.mxu0 0
    %110 = vmatpush.bf16.msra.mxu0 0
    %111 = vmatpush.bf16.msra.mxu0 0
    %112 = vmatpush.bf16.msra.mxu0 0
    %113 = vmatpush.bf16.msra.mxu0 0
    %114 = vmatpush.bf16.msra.mxu0 %v101
    %115 = vmatmul.bf16.gmra.mxu0 %v105
    %v116 = vpop.f32.mrf.mxu0
    %v117 = vadd.f32 %v95, %v116
    %v118 = vpop.f32.mrf.mxu0
    %119 = vdwg.mxu0
    %v120 = vmax.f32 %v117, 0.0
    %v121 = vpack.c.bf16 %v120, %v120
    %v122 = vld [vmem:[#allocation7] sm:$0xf]
    %v123 = vld [vmem:[#allocation7 + $0x4] sm:$0xf]
    %v124 = vld [vmem:[#allocation7 + $0x8] sm:$0xf]
    %v125 = vld [vmem:[#allocation7 + $0xc] sm:$0xf]
    %v126 = vld [vmem:[%s4] sm:$0x1]
    %v128 = vperm.slane %v126, 0
    %v134 = vunpack.c.l.b16 %v122
    %v135 = vunpack.c.l.b16 %v123
    %v136 = vunpack.c.l.b16 %v124
    %v137 = vunpack.c.l.b16 %v125
    %v138 = vpack.c.b16 %v135, %v134
    %v139 = vpack.c.b16 %v137, %v136
    %vm142 = vcmask 261120
    %v144 = vsel %vm142, %v121, 0
    %146 = vmatpush.bf16.msra.mxu0 0
    %147 = vmatpush.bf16.msra.mxu0 0
    %148 = vmatpush.bf16.msra.mxu0 0
    %149 = vmatpush.bf16.msra.mxu0 0
    %150 = vmatpush.bf16.msra.mxu0 0
    %151 = vmatpush.bf16.msra.mxu0 0
    %152 = vmatpush.bf16.msra.mxu0 %v139
    %153 = vmatpush.bf16.msra.mxu0 %v138
    %154 = vmatmul.bf16.gmra.mxu0 %v144
    %v155 = vpop.f32.mrf.mxu0
    %v156 = vadd.f32 %v128, %v155
    %v157 = vpop.f32.mrf.mxu0
    %158 = vdwg.mxu0
    %v159 = vmax.f32 %v156, 0.0
    %v160 = vpack.c.bf16 %v159, %v159
    %v161 = vld [vmem:[#allocation8] sm:$0xf]
    %v162 = vld [vmem:[#allocation8 + $0x4] sm:$0xf]
    %v163 = vld [vmem:[#allocation8 + $0x8] sm:$0xf]
    %v164 = vld [vmem:[#allocation8 + $0xc] sm:$0xf]
    %v165 = vld [vmem:[%s6] sm:$0x1]
    %v167 = vperm.slane %v165, 0
    %v173 = vunpack.c.l.b16 %v161
    %v174 = vunpack.c.l.b16 %v162
    %v175 = vunpack.c.l.b16 %v163
    %v176 = vunpack.c.l.b16 %v164
    %v177 = vpack.c.b16 %v174, %v173
    %v178 = vpack.c.b16 %v176, %v175
    %v182 = vsel %vm142, %v160, 0
    %184 = vmatpush.bf16.msra.mxu0 0
    %185 = vmatpush.bf16.msra.mxu0 0
    %186 = vmatpush.bf16.msra.mxu0 0
    %187 = vmatpush.bf16.msra.mxu0 0
    %188 = vmatpush.bf16.msra.mxu0 0
    %189 = vmatpush.bf16.msra.mxu0 0
    %190 = vmatpush.bf16.msra.mxu0 %v178
    %191 = vmatpush.bf16.msra.mxu0 %v177
    %192 = vmatmul.bf16.gmra.mxu0 %v182
    %v193 = vpop.f32.mrf.mxu0
    %v194 = vadd.f32 %v167, %v193
    %v195 = vpop.f32.mrf.mxu0
    %196 = vdwg.mxu0
    %v197 = vtanh.pop %v194
    %v198 = vmul.f32 %v197, 2.0
    %199 = vst [vmem:[#allocation10] sm:$0xff] %v198
    // Predicated region
    $region46: #{tpu_custom_call.1} parent=1 // pred_check
      _
    $region47: #{tpu_custom_call.1} parent=1 // pred_check_branch
      %201 = sbr.rel (0) target = $region49
    $region48: #{tpu_custom_call.1} parent=1 // pred_region
      %203 = vsyncadd [#allocation4], 0
      %s205 = sshll.u32 [#allocation10], 4
      %s206 = int_to_ptr.vmem [resolvable:$true] %s205
      %s207 = sshll.u32 %s7, 4
      %s208 = int_to_ptr.hbm [resolvable:$true] %s207
      %210 = dma.vmem_to_hbm [thread:$0]  %s206, 128, %s208, [#allocation4]
    $region49: #{tpu_custom_call.1} parent=1 // pred_fallthru
      _
    // Predicated region
    $region50: #{tpu_custom_call.1} parent=1 // pred_check
      _
    $region51: #{tpu_custom_call.1} parent=1 // pred_check_branch
      %212 = sbr.rel (0) target = $region53
    $region52: #{tpu_custom_call.1} parent=1 // pred_region
      %214 = dma.done [#allocation4], 128
    $region53: #{tpu_custom_call.1} parent=1 // pred_fallthru
      _
    %215 = vsyncpa [#allocation3], 1
    %216 = vsyncpa [#allocation6], 1
    %217 = vsyncpa [#allocation9], 1
    %218 = vsyncpa [#allocation4], 1

</llo_original>
